<compile_context>
chip_gen: v7x
topology: tpu7x:2x2x1
jax: 0.10.0
libtpu: 0.0.40
codegen_flags: <defaults>
</compile_context>

<pallas_src>
import functools

import jax
import jax.numpy as jnp
from jax.experimental import pallas as pl
from jax.experimental.pallas import tpu as pltpu


# ---------------------------------------------------------------------------
# quantizers (forward-pass / STE values, as in the PyTorch module)
# ---------------------------------------------------------------------------
def _activation_quant(x):
    """Per-token (per-row) 8-bit quantization; returns dequantized values."""
    scale = 127.0 / jnp.maximum(jnp.max(jnp.abs(x), axis=-1, keepdims=True), 1e-5)
    return jnp.clip(jnp.round(x * scale), -128.0, 127.0) / scale


def _activation_quant_int(x):
    """Same quantizer, but returns (integer values, inverse scale) separately."""
    amax = jnp.maximum(jnp.max(jnp.abs(x), axis=-1, keepdims=True), 1e-5)
    q = jnp.clip(jnp.round(x * (127.0 / amax)), -128.0, 127.0)
    return q, amax / 127.0


def _weight_quant_per_expert(w):
    """Per-expert per-tensor 1.58-bit quantization -> (ternary values, inverse scale)."""
    mean_abs = jnp.mean(jnp.abs(w), axis=tuple(range(1, w.ndim)), keepdims=True)
    inv_scale = jnp.maximum(mean_abs, 1e-5)
    tern = jnp.clip(jnp.round(w / inv_scale), -1.0, 1.0)
    return tern, inv_scale


def _silu(x):
    return x * jax.nn.sigmoid(x)


def _default_use_int8():
    """Native int8 MXU only where supported & profitable (v5/v6); bf16 on v7x/v4."""
    try:
        kind = jax.devices()[0].device_kind.lower()
    except Exception:
        return False
    return (("v5" in kind) or ("v6" in kind)) and ("v7" not in kind)


def _pick_tile_d(d):
    """Weight-streaming tile along D. Multiple of 128 (or full D for small/odd D)."""
    if d <= 512:
        return d
    for cand in (512, 384, 256, 128):
        if d % cand == 0:
            return cand
    return d  # odd size: fall back to full-D weight tiles


# ---------------------------------------------------------------------------
# Pallas kernel: grid = (block, 2*ND).  One block = TN token rows of ONE expert.
#   phase 1 (kd <  ND): accumulate hv/hg over D tiles of w1 (contraction dim).
#   phase 2 (kd >= ND): SiLU + 8-bit requant once, then per-D-tile w2 matmul + store.
# ---------------------------------------------------------------------------
def _moe_block_kernel(bm_ref, xg_ref, meta_ref, *refs, glu, nd, use_int8):
    """
    bm_ref   : (NB, 2) int32, SMEM (scalar-prefetched): [expert_id, n_valid_rows]
    xg_ref   : (TN, tD) int8/bf16 quantized activations (integer values)
    meta_ref : (TN, 2)  f32   [inv_act_scale * inv_w1_scale, gate * inv_w2_scale]
    w1v_ref  : (1, tD, H) int8/bf16 ternary weights (value half)
    w1g_ref  : (1, tD, H) int8/bf16 ternary weights (GLU gate half)   [only if glu]
    w2_ref   : (1, H, tD) int8/bf16 ternary weights
    out_ref  : (TN, tD) bf16  gate-scaled expert output slab
    hv_acc   : (TN, H) f32 scratch (accumulator; holds requantized hq after phase 1)
    hg_acc   : (TN, H) f32 scratch                                     [only if glu]
    oscale   : (TN, 1) f32 scratch (per-row output scale)
    """
    if glu:
        w1v_ref, w1g_ref, w2_ref, out_ref, hv_acc, hg_acc, oscale = refs
    else:
        w1v_ref, w2_ref, out_ref, hv_acc, oscale = refs
        hg_acc = None

    i = pl.program_id(0)
    kd = pl.program_id(1)
    n_valid = bm_ref[i, 1]
    acc_t = jnp.int32 if use_int8 else jnp.float32  # dot accumulation dtype

    @pl.when(jnp.logical_and(n_valid > 0, kd == 0))
    def _init():
        hv_acc[...] = jnp.zeros_like(hv_acc)
        if glu:
            hg_acc[...] = jnp.zeros_like(hg_acc)

    @pl.when(jnp.logical_and(n_valid > 0, kd < nd))
    def _phase1():
        xq = xg_ref[...]                              # (TN, tD) integer values
        pv = jnp.dot(xq, w1v_ref[0], preferred_element_type=acc_t)
        hv_acc[...] += pv.astype(jnp.float32)
        if glu:
            pg = jnp.dot(xq, w1g_ref[0], preferred_element_type=acc_t)
            hg_acc[...] += pg.astype(jnp.float32)

    @pl.when(jnp.logical_and(n_valid > 0, kd == nd))
    def _activation_and_requant():
        meta = meta_ref[...]
        s1 = meta[:, 0:1]                             # (1/act_scale) * (1/w1_scale)
        s2 = meta[:, 1:2]                             # gate * (1/w2_scale)
        hv = hv_acc[...] * s1
        h = hv * jax.nn.sigmoid(hv)                   # SiLU(value)
        if glu:
            h = h * (hg_acc[...] * s1)                # * gate half
        # second per-row 8-bit activation quant; keep INTEGER values for the MXU
        amax = jnp.maximum(jnp.max(jnp.abs(h), axis=-1, keepdims=True), 1e-5)
        hv_acc[...] = jnp.clip(jnp.round(h * (127.0 / amax)), -128.0, 127.0)
        oscale[...] = (amax * (1.0 / 127.0)) * s2

    @pl.when(jnp.logical_and(n_valid > 0, kd >= nd))
    def _phase2():
        if use_int8:
            lhs = hv_acc[...].astype(jnp.int32).astype(jnp.int8)
        else:
            lhs = hv_acc[...].astype(jnp.bfloat16)
        o = jnp.dot(lhs, w2_ref[0], preferred_element_type=acc_t).astype(jnp.float32)
        out_ref[...] = (o * oscale[...]).astype(out_ref.dtype)
    # n_valid == 0 (padding block): nothing is computed or written; whatever stale data
    # the output buffer holds is scatter-added into the dropped sentinel token.


def _moe_grouped_matmul(block_meta, xg, meta, w1v, w1g, w2, *,
                        glu, tn, d, h, td, use_int8):
    nb = block_meta.shape[0]
    nr = xg.shape[0]
    nd = d // td
    n_w1 = 2 if glu else 1

    def xg_map(i, kd, bm):
        return (i, jnp.minimum(kd, nd - 1))           # stays resident during phase 2

    def meta_map(i, kd, bm):
        return (i, 0)

    def w1_map(i, kd, bm):
        return (bm[i, 0], jnp.minimum(kd, nd - 1), 0)  # data-dependent expert select

    def w2_map(i, kd, bm):
        return (bm[i, 0], 0, jnp.maximum(kd - nd, 0))

    def out_map(i, kd, bm):
        return (i, jnp.maximum(kd - nd, 0))

    in_specs = [
        pl.BlockSpec((tn, td), xg_map),               # activations (integer values)
        pl.BlockSpec((tn, 2), meta_map),              # per-row scales / gate
        pl.BlockSpec((1, td, h), w1_map),             # w1 (value half), streamed over D
    ]
    inputs = [xg, meta, w1v]
    if glu:
        in_specs.append(pl.BlockSpec((1, td, h), w1_map))   # w1 (gate half)
        inputs.append(w1g)
    in_specs.append(pl.BlockSpec((1, h, td), w2_map))       # w2, streamed over D
    inputs.append(w2)

    scratch_shapes = [pltpu.VMEM((tn, h), jnp.float32)]      # hv accumulator / hq
    if glu:
        scratch_shapes.append(pltpu.VMEM((tn, h), jnp.float32))  # hg accumulator
    scratch_shapes.append(pltpu.VMEM((tn, 1), jnp.float32))      # per-row out scale

    # --- explicit VMEM budget sized to the actual working set (+30% headroom) ---
    wbytes = 1 if use_int8 else 2
    abytes = 1 if use_int8 else 2
    weight_bytes = (n_w1 + 1) * td * h * wbytes * 2           # double-buffered tiles
    io_bytes = tn * td * abytes * 2 + tn * 2 * 4 * 2 + tn * td * 2 * 2
    scratch_bytes = tn * h * 4 * n_w1 + tn * 4
    needed = weight_bytes + io_bytes + scratch_bytes
    vmem_limit = int(min(max(int(needed * 1.3) + (2 << 20), 16 << 20), 100 << 20))

    cost = pl.CostEstimate(
        flops=2 * nb * tn * d * h * (n_w1 + 1),
        transcendentals=nb * tn * h,
        bytes_accessed=nb * ((n_w1 + 1) * d * h * wbytes
                             + tn * d * abytes + tn * d * 2 + tn * 2 * 4),
    )

    kernel = functools.partial(_moe_block_kernel, glu=glu, nd=nd, use_int8=use_int8)

    return pl.pallas_call(
        kernel,
        out_shape=jax.ShapeDtypeStruct((nr, d), jnp.bfloat16),
        grid_spec=pltpu.PrefetchScalarGridSpec(
            num_scalar_prefetch=1,
            grid=(nb, 2 * nd),
            in_specs=in_specs,
            out_specs=pl.BlockSpec((tn, td), out_map),
            scratch_shapes=scratch_shapes,
        ),
        compiler_params=pltpu.CompilerParams(
            dimension_semantics=("parallel", "arbitrary"),
            vmem_limit_bytes=vmem_limit,
        ),
        cost_estimate=cost,
    )(block_meta, *inputs)


# ---------------------------------------------------------------------------
# full forward (router + grouping + scatter-add are plain-JAX glue)
# ---------------------------------------------------------------------------
def moe_forward(x, params, *, top_k, glu=True, block_rows=512, use_int8=None):
    """x: (bsz, length, input_size) f32 -> (y, aux_loss). Mirrors MoE.batch_forward."""
    bsz, length, D = x.shape
    N = bsz * length
    x_flat = x.reshape(N, D).astype(jnp.float32)

    if use_int8 is None:
        use_int8 = _default_use_int8()
    op_dtype = jnp.int8 if use_int8 else jnp.bfloat16

    wg = params["gate_w"]        # (E, D)
    w1 = params["w1"]            # (E, D, 2H) if glu else (E, D, H)
    w2 = params["w2"]            # (E, H, D)
    bias = params["bias"]        # (D,)
    E = wg.shape[0]
    H = w2.shape[1]
    k = min(top_k, E)

    # --- top-k gating router ---
    logits = x_flat @ wg.T                                    # (N, E)
    top_vals, top_idx = jax.lax.top_k(logits, k)              # (N, k)
    top_gates = jax.nn.softmax(top_vals, axis=-1)             # (N, k)

    # load-balancing aux loss (glue)
    probs = jax.nn.softmax(logits, axis=-1)
    routed = jnp.sum(jax.nn.one_hot(top_idx, E, dtype=jnp.float32), axis=1)  # (N, E)
    aux_loss = E * jnp.sum(jnp.mean(routed, axis=0) * jnp.mean(probs, axis=0))

    # --- quantization hoisted out of the kernel ---
    xq_int, inv_act = _activation_quant_int(x_flat)           # integer values, (N, 1)
    xq_cast = xq_int.astype(op_dtype)
    inv_act = inv_act[:, 0]                                   # (N,)

    w1_t, w1_inv = _weight_quant_per_expert(w1)               # ternary, (E,1,1)
    w2_t, w2_inv = _weight_quant_per_expert(w2)
    w1_inv = w1_inv.reshape(E)
    w2_inv = w2_inv.reshape(E)
    if glu:
        w1v = w1_t[:, :, :H].astype(op_dtype)                 # (E, D, H) value half
        w1g = w1_t[:, :, H:].astype(op_dtype)                 # (E, D, H) gate half
    else:
        w1v = w1_t.astype(op_dtype)
        w1g = None
    w2_c = w2_t.astype(op_dtype)

    # --- grouped (sorted-by-expert) dispatch; per-expert blocks padded to TN rows ---
    Nk = N * k
    TN = max(32, min(block_rows, ((Nk + 31) // 32) * 32))     # rows per block
    NB = pl.cdiv(Nk, TN) + E                                  # static upper bound
    NR = NB * TN
    TD = _pick_tile_d(D)

    flat_expert = top_idx.reshape(-1).astype(jnp.int32)       # (Nk,)
    flat_gate = top_gates.reshape(-1)
    flat_token = jnp.repeat(jnp.arange(N, dtype=jnp.int32), k)

    order = jnp.argsort(flat_expert)
    s_expert = flat_expert[order]
    s_gate = flat_gate[order]
    s_token = flat_token[order]

    counts = jnp.bincount(flat_expert, length=E).astype(jnp.int32)   # (E,)
    blocks_per_e = (counts + TN - 1) // TN
    blk_cum = jnp.cumsum(blocks_per_e)
    block_start_e = (blk_cum - blocks_per_e).astype(jnp.int32)       # exclusive cumsum
    group_off_e = (jnp.cumsum(counts) - counts).astype(jnp.int32)

    rank = jnp.arange(Nk, dtype=jnp.int32) - group_off_e[s_expert]
    dest = block_start_e[s_expert] * TN + rank                       # unique dest rows

    # gather-based staging: dest row -> sorted-pair index (sentinel Nk for padding).
    pair_at_row = jnp.full((NR,), Nk, jnp.int32).at[dest].set(
        jnp.arange(Nk, dtype=jnp.int32))
    row_token = jnp.concatenate(
        [s_token, jnp.array([N], jnp.int32)])[pair_at_row]           # padding -> token N
    xg = jnp.concatenate([xq_cast, jnp.zeros((1, D), op_dtype)])[row_token]

    row_s1 = inv_act[s_token] * w1_inv[s_expert]                     # post-matmul-1 scale
    row_s2 = s_gate * w2_inv[s_expert]                               # post-matmul-2 scale
    meta = jnp.concatenate(
        [jnp.stack([row_s1, row_s2], axis=-1).astype(jnp.float32),
         jnp.zeros((1, 2), jnp.float32)])[pair_at_row]               # (NR, 2)

    b_idx = jnp.arange(NB, dtype=jnp.int32)
    total_blocks = blk_cum[-1]
    raw_e = jnp.searchsorted(blk_cum, b_idx, side="right").astype(jnp.int32)
    # trailing padding blocks reuse the last real expert id -> no spurious weight DMA
    blk_expert = jnp.where(b_idx < total_blocks,
                           jnp.minimum(raw_e, E - 1), s_expert[-1]).astype(jnp.int32)
    blk_nrows = jnp.clip(
        counts[blk_expert] - (b_idx - block_start_e[blk_expert]) * TN, 0, TN)
    block_meta = jnp.stack([blk_expert, blk_nrows], axis=-1).astype(jnp.int32)

    # --- expert compute (Pallas kernel) ---
    out_rows = _moe_grouped_matmul(block_meta, xg, meta, w1v, w1g, w2_c,
                                   glu=glu, tn=TN, d=D, h=H, td=TD,
                                   use_int8=use_int8)

    # scatter-add back to tokens (padding rows land on the dropped sentinel row N)
    y = jnp.zeros((N + 1, D), jnp.float32).at[row_token].add(
        out_rows.astype(jnp.float32))
    y = y[:N] + bias[None, :]
    return y.reshape(bsz, length, D), aux_loss


# ---------------------------------------------------------------------------
# pure-JAX reference with PyTorch-module semantics (dense gate-masked form)
# ---------------------------------------------------------------------------
def _reference(x, params, *, top_k, glu=True):
    bsz, length, D = x.shape
    N = bsz * length
    x_flat = x.reshape(N, D)
    wg, w1, w2, bias = params["gate_w"], params["w1"], params["w2"], params["bias"]
    E, H = wg.shape[0], w2.shape[1]
    k = min(top_k, E)

    logits = x_flat @ wg.T
    top_vals, top_idx = jax.lax.top_k(logits, k)
    top_gates = jax.nn.softmax(top_vals, axis=-1)
    gates = jnp.zeros((N, E)).at[jnp.arange(N)[:, None], top_idx].set(top_gates)

    xq = _activation_quant(x_flat)
    w1_t, w1_s = _weight_quant_per_expert(w1)
    w2_t, w2_s = _weight_quant_per_expert(w2)
    w1q = w1_t * w1_s
    w2q = w2_t * w2_s

    out = jnp.zeros((N, D), jnp.float32)
    for e in range(E):
        h = xq @ w1q[e]
        if glu:
            h = _silu(h[:, :H]) * h[:, H:]
        else:
            h = _silu(h)
        hq = _activation_quant(h)
        out = out + (hq @ w2q[e]) * gates[:, e:e + 1]
    return (out + bias[None, :]).reshape(bsz, length, D)


if __name__ == "__main__":
    # small shapes consistent with the module's forward
    bsz, length = 2, 8
    input_size, hidden_size = 32, 32
    num_experts, top_k = 4, 2
    glu = True

    key = jax.random.PRNGKey(0)
    kx, kg, k1, k2 = jax.random.split(key, 4)

    x = jax.random.normal(kx, (bsz, length, input_size), jnp.float32)
    Dh = hidden_size * 2 if glu else hidden_size
    params = {
        "gate_w": 0.1 * jax.random.normal(kg, (num_experts, input_size), jnp.float32),
        "w1": 0.3 * jax.random.normal(k1, (num_experts, input_size, Dh), jnp.float32),
        "w2": 0.3 * jax.random.normal(k2, (num_experts, hidden_size, input_size), jnp.float32),
        "bias": 0.01 * jnp.ones((input_size,), jnp.float32),
    }

    fwd = jax.jit(functools.partial(moe_forward, top_k=top_k, glu=glu))
    y, aux = fwd(x, params)
    y = jax.block_until_ready(y)
    aux = jax.block_until_ready(aux)

    y_ref = _reference(x, params, top_k=top_k, glu=glu)
    # The integer MXU path (bf16 or int8) is an algebraic refactor of the f32 reference
    # math; tolerance absorbs the bf16 output cast and rare round-to-nearest flips in the
    # second 8-bit activation quant.
    assert bool(jnp.all(jnp.isfinite(y))), "non-finite output"
    assert bool(jnp.isfinite(aux)), "non-finite aux loss"
    assert jnp.allclose(y, y_ref, atol=3e-2, rtol=3e-2), (
        "mismatch vs. reference: max abs diff = %g"
        % float(jnp.max(jnp.abs(y - y_ref))))

    print("KERNEL_OK")
</pallas_src>

<mosaic_0001>
module attributes {stable_mosaic.version = 11 : i64} {
  func.func private @main(%arg0: i32) attributes {dimension_semantics = [#tpu.dimension_semantics<core_parallel>], iteration_bounds = array<i64: 2>, tpu.core_type = #tpu.core_type<sc_scalar_subcore>, window_params = []} {
    return
  }
}

module attributes {stable_mosaic.version = 11 : i64} {
  func.func private @main(%arg0: i32) attributes {dimension_semantics = [#tpu.dimension_semantics<core_parallel>], iteration_bounds = array<i64: 2>, tpu.core_type = #tpu.core_type<sc_scalar_subcore>, window_params = []} {
    return
  }
}

module attributes {stable_mosaic.version = 11 : i64} {
  func.func @_moe_block_kernel(%arg0: i32, %arg1: i32, %arg2: memref<5x2xi32, #tpu.memory_space<smem>>, %arg3: memref<32x32xbf16, #tpu.memory_space<vmem>>, %arg4: memref<32x2xf32, #tpu.memory_space<vmem>>, %arg5: memref<1x32x32xbf16, #tpu.memory_space<vmem>>, %arg6: memref<1x32x32xbf16, #tpu.memory_space<vmem>>, %arg7: memref<1x32x32xbf16, #tpu.memory_space<vmem>>, %arg8: memref<32x32xbf16, #tpu.memory_space<vmem>>, %arg9: memref<32x32xf32, #tpu.memory_space<vmem>>, %arg10: memref<32x32xf32, #tpu.memory_space<vmem>>, %arg11: memref<32x1xf32, #tpu.memory_space<vmem>>) attributes {dimension_semantics = [#tpu.dimension_semantics<parallel>, #tpu.dimension_semantics<arbitrary>], iteration_bounds = array<i64: 5, 2>, scalar_prefetch = 1 : i64, scratch_operands = 3 : i64, tpu.core_type = #tpu.core_type<tc>, window_params = [{transform_indices = @transform_0, window_bounds = array<i64: 32, 32>}, {transform_indices = @transform_1, window_bounds = array<i64: 32, 2>}, {transform_indices = @transform_2, window_bounds = array<i64: 1, 32, 32>}, {transform_indices = @transform_3, window_bounds = array<i64: 1, 32, 32>}, {transform_indices = @transform_4, window_bounds = array<i64: 1, 32, 32>}, {transform_indices = @transform_5, window_bounds = array<i64: 32, 32>}]} {
    %0 = arith.index_cast %arg0 : i32 to index
    %c1 = arith.constant 1 : index
    %1 = memref.load %arg2[%0, %c1] : memref<5x2xi32, #tpu.memory_space<smem>>
    %c0_i32 = arith.constant 0 : i32
    %2 = arith.cmpi sgt, %1, %c0_i32 : i32
    %c0_i32_0 = arith.constant 0 : i32
    %3 = arith.cmpi eq, %arg1, %c0_i32_0 : i32
    %4 = arith.andi %2, %3 : i1
    %5 = arith.extui %4 : i1 to i32
    %c0_i32_1 = arith.constant 0 : i32
    %6 = arith.cmpi ne, %5, %c0_i32_1 : i32
    scf.if %6 {
      %cst = arith.constant 0.000000e+00 : f32
      %22 = vector.broadcast %cst : f32 to vector<32x32xf32>
      %c0 = arith.constant 0 : index
      %c0_10 = arith.constant 0 : index
      %23 = vector.load %arg9[%c0, %c0_10] : memref<32x32xf32, #tpu.memory_space<vmem>>, vector<32x32xf32>
      tpu.vector_store %arg9[%c0, %c0_10], %22 {strides = array<i32>} : memref<32x32xf32, #tpu.memory_space<vmem>>, vector<32x32xf32>,
      %cst_11 = arith.constant 0.000000e+00 : f32
      %24 = vector.broadcast %cst_11 : f32 to vector<32x32xf32>
      %c0_12 = arith.constant 0 : index
      %c0_13 = arith.constant 0 : index
      %25 = vector.load %arg10[%c0_12, %c0_13] : memref<32x32xf32, #tpu.memory_space<vmem>>, vector<32x32xf32>
      tpu.vector_store %arg10[%c0_12, %c0_13], %24 {strides = array<i32>} : memref<32x32xf32, #tpu.memory_space<vmem>>, vector<32x32xf32>,
    } else {
    }
    %c0_i32_2 = arith.constant 0 : i32
    %7 = arith.cmpi sgt, %1, %c0_i32_2 : i32
    %c1_i32 = arith.constant 1 : i32
    %8 = arith.cmpi slt, %arg1, %c1_i32 : i32
    %9 = arith.andi %7, %8 : i1
    %10 = arith.extui %9 : i1 to i32
    %c0_i32_3 = arith.constant 0 : i32
    %11 = arith.cmpi ne, %10, %c0_i32_3 : i32
    scf.if %11 {
      %c0 = arith.constant 0 : index
      %c0_10 = arith.constant 0 : index
      %22 = vector.load %arg3[%c0, %c0_10] : memref<32x32xbf16, #tpu.memory_space<vmem>>, vector<32x32xbf16>
      %c0_11 = arith.constant 0 : index
      %c0_12 = arith.constant 0 : index
      %c0_13 = arith.constant 0 : index
      %23 = vector.load %arg5[%c0_11, %c0_12, %c0_13] : memref<1x32x32xbf16, #tpu.memory_space<vmem>>, vector<1x32x32xbf16>
      %24 = vector.shape_cast %23 : vector<1x32x32xbf16> to vector<32x32xbf16>
      %cst = arith.constant dense<0.000000e+00> : vector<32x32xf32>
      %25 = tpu.matmul %22, %24, %cst {dimension_numbers = #tpu.dot_dimension_numbers<[1], [0], [0], [1], [0, 0, 1, 1], [], []>} : vector<32x32xbf16>, vector<32x32xbf16>, vector<32x32xf32> -> vector<32x32xf32>
      %c0_14 = arith.constant 0 : index
      %c0_15 = arith.constant 0 : index
      %26 = vector.load %arg9[%c0_14, %c0_15] : memref<32x32xf32, #tpu.memory_space<vmem>>, vector<32x32xf32>
      %27 = arith.addf %26, %25 : vector<32x32xf32>
      %c0_16 = arith.constant 0 : index
      %c0_17 = arith.constant 0 : index
      %28 = vector.load %arg9[%c0_16, %c0_17] : memref<32x32xf32, #tpu.memory_space<vmem>>, vector<32x32xf32>
      tpu.vector_store %arg9[%c0_16, %c0_17], %27 {strides = array<i32>} : memref<32x32xf32, #tpu.memory_space<vmem>>, vector<32x32xf32>,
      %c0_18 = arith.constant 0 : index
      %c0_19 = arith.constant 0 : index
      %c0_20 = arith.constant 0 : index
      %29 = vector.load %arg6[%c0_18, %c0_19, %c0_20] : memref<1x32x32xbf16, #tpu.memory_space<vmem>>, vector<1x32x32xbf16>
      %30 = vector.shape_cast %29 : vector<1x32x32xbf16> to vector<32x32xbf16>
      %cst_21 = arith.constant dense<0.000000e+00> : vector<32x32xf32>
      %31 = tpu.matmul %22, %30, %cst_21 {dimension_numbers = #tpu.dot_dimension_numbers<[1], [0], [0], [1], [0, 0, 1, 1], [], []>} : vector<32x32xbf16>, vector<32x32xbf16>, vector<32x32xf32> -> vector<32x32xf32>
      %c0_22 = arith.constant 0 : index
      %c0_23 = arith.constant 0 : index
      %32 = vector.load %arg10[%c0_22, %c0_23] : memref<32x32xf32, #tpu.memory_space<vmem>>, vector<32x32xf32>
      %33 = arith.addf %32, %31 : vector<32x32xf32>
      %c0_24 = arith.constant 0 : index
      %c0_25 = arith.constant 0 : index
      %34 = vector.load %arg10[%c0_24, %c0_25] : memref<32x32xf32, #tpu.memory_space<vmem>>, vector<32x32xf32>
      tpu.vector_store %arg10[%c0_24, %c0_25], %33 {strides = array<i32>} : memref<32x32xf32, #tpu.memory_space<vmem>>, vector<32x32xf32>,
    } else {
    }
    %c0_i32_4 = arith.constant 0 : i32
    %12 = arith.cmpi sgt, %1, %c0_i32_4 : i32
    %c1_i32_5 = arith.constant 1 : i32
    %13 = arith.cmpi eq, %arg1, %c1_i32_5 : i32
    %14 = arith.andi %12, %13 : i1
    %15 = arith.extui %14 : i1 to i32
    %c0_i32_6 = arith.constant 0 : i32
    %16 = arith.cmpi ne, %15, %c0_i32_6 : i32
    scf.if %16 {
      %c0 = arith.constant 0 : index
      %c0_10 = arith.constant 0 : index
      %22 = vector.load %arg4[%c0, %c0_10] : memref<32x2xf32, #tpu.memory_space<vmem>>, vector<32x2xf32>
      %23 = vector.extract_strided_slice %22 {offsets = [0, 0], sizes = [32, 1], strides = [1, 1]} : vector<32x2xf32> to vector<32x1xf32>
      %24 = vector.extract_strided_slice %22 {offsets = [0, 1], sizes = [32, 1], strides = [1, 1]} : vector<32x2xf32> to vector<32x1xf32>
      %c0_11 = arith.constant 0 : index
      %c0_12 = arith.constant 0 : index
      %25 = vector.load %arg9[%c0_11, %c0_12] : memref<32x32xf32, #tpu.memory_space<vmem>>, vector<32x32xf32>
      %26 = vector.broadcast %23 : vector<32x1xf32> to vector<32x32xf32>
      %27 = arith.mulf %25, %26 : vector<32x32xf32>
      %28 = arith.negf %27 : vector<32x32xf32>
      %29 = math.exp %28 : vector<32x32xf32>
      %cst = arith.constant 1.000000e+00 : f32
      %30 = vector.broadcast %cst : f32 to vector<32x32xf32>
      %31 = arith.addf %30, %29 : vector<32x32xf32>
      %32 = arith.divf %30, %31 : vector<32x32xf32>
      %33 = arith.mulf %27, %32 : vector<32x32xf32>
      %c0_13 = arith.constant 0 : index
      %c0_14 = arith.constant 0 : index
      %34 = vector.load %arg10[%c0_13, %c0_14] : memref<32x32xf32, #tpu.memory_space<vmem>>, vector<32x32xf32>
      %35 = vector.broadcast %23 : vector<32x1xf32> to vector<32x32xf32>
      %36 = arith.mulf %34, %35 : vector<32x32xf32>
      %37 = arith.mulf %33, %36 : vector<32x32xf32>
      %38 = math.absf %37 : vector<32x32xf32>
      %cst_15 = arith.constant dense<0xFF800000> : vector<32xf32>
      %39 = vector.multi_reduction <maximumf>, %38, %cst_15 [1] : vector<32x32xf32> to vector<32xf32>
      %40 = vector.shape_cast %39 : vector<32xf32> to vector<32x1xf32>
      %cst_16 = arith.constant 9.99999974E-6 : f32
      %41 = vector.broadcast %cst_16 : f32 to vector<32x1xf32>
      %42 = arith.maximumf %40, %41 : vector<32x1xf32>
      %cst_17 = arith.constant 1.270000e+02 : f32
      %43 = vector.broadcast %cst_17 : f32 to vector<32x1xf32>
      %44 = arith.divf %43, %42 : vector<32x1xf32>
      %45 = vector.broadcast %44 : vector<32x1xf32> to vector<32x32xf32>
      %46 = arith.mulf %37, %45 : vector<32x32xf32>
      %47 = math.roundeven %46 : vector<32x32xf32>
      %cst_18 = arith.constant -1.280000e+02 : f32
      %cst_19 = arith.constant 1.270000e+02 : f32
      %48 = vector.broadcast %cst_18 : f32 to vector<32x32xf32>
      %49 = arith.maximumf %48, %47 : vector<32x32xf32>
      %50 = vector.broadcast %cst_19 : f32 to vector<32x32xf32>
      %51 = arith.minimumf %50, %49 : vector<32x32xf32>
      %c0_20 = arith.constant 0 : index
      %c0_21 = arith.constant 0 : index
      %52 = vector.load %arg9[%c0_20, %c0_21] : memref<32x32xf32, #tpu.memory_space<vmem>>, vector<32x32xf32>
      tpu.vector_store %arg9[%c0_20, %c0_21], %51 {strides = array<i32>} : memref<32x32xf32, #tpu.memory_space<vmem>>, vector<32x32xf32>,
      %cst_22 = arith.constant 0.00787401571 : f32
      %53 = vector.broadcast %cst_22 : f32 to vector<32x1xf32>
      %54 = arith.mulf %42, %53 : vector<32x1xf32>
      %55 = arith.mulf %54, %24 : vector<32x1xf32>
      %c0_23 = arith.constant 0 : index
      %c0_24 = arith.constant 0 : index
      %56 = vector.load %arg11[%c0_23, %c0_24] : memref<32x1xf32, #tpu.memory_space<vmem>>, vector<32x1xf32>
      tpu.vector_store %arg11[%c0_23, %c0_24], %55 {strides = array<i32>} : memref<32x1xf32, #tpu.memory_space<vmem>>, vector<32x1xf32>,
    } else {
    }
    %c0_i32_7 = arith.constant 0 : i32
    %17 = arith.cmpi sgt, %1, %c0_i32_7 : i32
    %c1_i32_8 = arith.constant 1 : i32
    %18 = arith.cmpi sge, %arg1, %c1_i32_8 : i32
    %19 = arith.andi %17, %18 : i1
    %20 = arith.extui %19 : i1 to i32
    %c0_i32_9 = arith.constant 0 : i32
    %21 = arith.cmpi ne, %20, %c0_i32_9 : i32
    scf.if %21 {
      %c0 = arith.constant 0 : index
      %c0_10 = arith.constant 0 : index
      %22 = vector.load %arg9[%c0, %c0_10] : memref<32x32xf32, #tpu.memory_space<vmem>>, vector<32x32xf32>
      %23 = arith.truncf %22 : vector<32x32xf32> to vector<32x32xbf16>
      %c0_11 = arith.constant 0 : index
      %c0_12 = arith.constant 0 : index
      %c0_13 = arith.constant 0 : index
      %24 = vector.load %arg7[%c0_11, %c0_12, %c0_13] : memref<1x32x32xbf16, #tpu.memory_space<vmem>>, vector<1x32x32xbf16>
      %25 = vector.shape_cast %24 : vector<1x32x32xbf16> to vector<32x32xbf16>
      %cst = arith.constant dense<0.000000e+00> : vector<32x32xf32>
      %26 = tpu.matmul %23, %25, %cst {dimension_numbers = #tpu.dot_dimension_numbers<[1], [0], [0], [1], [0, 0, 1, 1], [], []>} : vector<32x32xbf16>, vector<32x32xbf16>, vector<32x32xf32> -> vector<32x32xf32>
      %c0_14 = arith.constant 0 : index
      %c0_15 = arith.constant 0 : index
      %27 = vector.load %arg11[%c0_14, %c0_15] : memref<32x1xf32, #tpu.memory_space<vmem>>, vector<32x1xf32>
      %28 = vector.broadcast %27 : vector<32x1xf32> to vector<32x32xf32>
      %29 = arith.mulf %26, %28 : vector<32x32xf32>
      %30 = arith.truncf %29 : vector<32x32xf32> to vector<32x32xbf16>
      %c0_16 = arith.constant 0 : index
      %c0_17 = arith.constant 0 : index
      %31 = vector.load %arg8[%c0_16, %c0_17] : memref<32x32xbf16, #tpu.memory_space<vmem>>, vector<32x32xbf16>
      tpu.vector_store %arg8[%c0_16, %c0_17], %30 {strides = array<i32>} : memref<32x32xbf16, #tpu.memory_space<vmem>>, vector<32x32xbf16>,
    } else {
    }
    return
  }
  func.func @transform_0(%arg0: i32, %arg1: i32, %arg2: memref<5x2xi32, #tpu.memory_space<smem>>) -> (i32, i32) {
    %c0_i32 = arith.constant 0 : i32
    %0 = arith.minsi %arg1, %c0_i32 : i32
    %c0_i32_0 = arith.constant 0 : i32
    return %arg0, %0 : i32, i32
  }
  func.func @transform_1(%arg0: i32, %arg1: i32, %arg2: memref<5x2xi32, #tpu.memory_space<smem>>) -> (i32, i32) {
    %c0_i32 = arith.constant 0 : i32
    %c0_i32_0 = arith.constant 0 : i32
    return %arg0, %c0_i32 : i32, i32
  }
  func.func @transform_2(%arg0: i32, %arg1: i32, %arg2: memref<5x2xi32, #tpu.memory_space<smem>>) -> (i32, i32, i32) {
    %0 = arith.index_cast %arg0 : i32 to index
    %c0 = arith.constant 0 : index
    %1 = memref.load %arg2[%0, %c0] : memref<5x2xi32, #tpu.memory_space<smem>>
    %c0_i32 = arith.constant 0 : i32
    %2 = arith.minsi %arg1, %c0_i32 : i32
    %c0_i32_0 = arith.constant 0 : i32
    %c0_i32_1 = arith.constant 0 : i32
    return %1, %2, %c0_i32_0 : i32, i32, i32
  }
  func.func @transform_3(%arg0: i32, %arg1: i32, %arg2: memref<5x2xi32, #tpu.memory_space<smem>>) -> (i32, i32, i32) {
    %0 = arith.index_cast %arg0 : i32 to index
    %c0 = arith.constant 0 : index
    %1 = memref.load %arg2[%0, %c0] : memref<5x2xi32, #tpu.memory_space<smem>>
    %c0_i32 = arith.constant 0 : i32
    %2 = arith.minsi %arg1, %c0_i32 : i32
    %c0_i32_0 = arith.constant 0 : i32
    %c0_i32_1 = arith.constant 0 : i32
    return %1, %2, %c0_i32_0 : i32, i32, i32
  }
  func.func @transform_4(%arg0: i32, %arg1: i32, %arg2: memref<5x2xi32, #tpu.memory_space<smem>>) -> (i32, i32, i32) {
    %0 = arith.index_cast %arg0 : i32 to index
    %c0 = arith.constant 0 : index
    %1 = memref.load %arg2[%0, %c0] : memref<5x2xi32, #tpu.memory_space<smem>>
    %c1_i32 = arith.constant 1 : i32
    %2 = arith.subi %arg1, %c1_i32 : i32
    %c0_i32 = arith.constant 0 : i32
    %3 = arith.maxsi %2, %c0_i32 : i32
    %c0_i32_0 = arith.constant 0 : i32
    %c0_i32_1 = arith.constant 0 : i32
    return %1, %c0_i32_0, %3 : i32, i32, i32
  }
  func.func @transform_5(%arg0: i32, %arg1: i32, %arg2: memref<5x2xi32, #tpu.memory_space<smem>>) -> (i32, i32) {
    %c1_i32 = arith.constant 1 : i32
    %0 = arith.subi %arg1, %c1_i32 : i32
    %c0_i32 = arith.constant 0 : i32
    %1 = arith.maxsi %0, %c0_i32 : i32
    %c0_i32_0 = arith.constant 0 : i32
    return %arg0, %1 : i32, i32
  }
}

</mosaic_0001>

<llo_original>
// kernel: custom-call.1
$region0: #{custom-call.1}
  %s0 = inlined_call_operand.vmem [shape: u32[5], index: 0, kind: output, shape index: {}]

// kernel: moe_forward.1
$region0: #{moe_forward.1}
  #allocation0 [shape = 'u32[]', space=smem, size = 0x4, offset = 0x4, fixed_abs, tag = 'smem constant byte address 0x4 - core index']
  #allocation1 [shape = 'u32[144,128]{1,0:T(1,128)}', space=vmem, size = 0x12000, scoped, tag = 'internal scratch']
  #allocation2 [shape = 'f32[32,32]{1,0:T(8,128)}', space=vmem, size = 0x4000, scoped, tag = 'scratch operand']
  #allocation3 [shape = 'f32[32,32]{1,0:T(8,128)}', space=vmem, size = 0x4000, scoped, tag = 'scratch operand']
  #allocation4 [shape = 'f32[32,1]{1,0:T(8,128)}', space=vmem, size = 0x4000, scoped, tag = 'scratch operand']
  #allocation5 [shape = 's32[1]{0}', space=sflag, size = 0x4, scoped, tag = 'scoped memory for moe_forward.1']
  #allocation6 [shape = 'u8[4096]{0}', space=smem, size = 0x1000, scoped, tag = 'prefetched SMEM operand 0']
  %s0 = inlined_call_operand.vmem [shape: s32[5,2], index: 0, kind: input, shape index: {}]
  %s1 = inlined_call_operand.vmem [shape: bf16[160,32], index: 1, kind: input, shape index: {}]
  %s2 = inlined_call_operand.vmem [shape: f32[160,2], index: 2, kind: input, shape index: {}]
  %s3 = inlined_call_operand.vmem [shape: bf16[4,32,32], index: 3, kind: input, shape index: {}]
  %s4 = inlined_call_operand.vmem [shape: bf16[4,32,32], index: 4, kind: input, shape index: {}]
  %s5 = inlined_call_operand.vmem [shape: bf16[4,32,32], index: 5, kind: input, shape index: {}]
  %s6 = inlined_call_operand.vmem [shape: bf16[160,32], index: 6, kind: output, shape index: {}]
  %s7 = sld [smem:[#allocation0]]
  $region69: #{moe_forward.1} parent=0
    _
  %s9 = ssub.s32 1, %s7
  %s10 = scalar_select 0, %s9, %s7
  %s11 = sshll.u32 %s0, 4
  %s12 = int_to_ptr.vmem [resolvable:$true] %s11
  %14 = dma.vmem_to_smem %s12, 128, [#allocation6], [#allocation5]
  %15 = dma.done [#allocation5], 128
  %16 = sfence
  loop: start=0, step=1, limit=12
  $region2: #{moe_forward.1} parent=0 // loop_pre_header
    _
  $region3: #{moe_forward.1} parent=0 // loop_header
    %s18 = sphi 0, %s22
    %p19 = scmp.ge.s32.totalorder %s18, 12
    %s25 = sphi 0, %s37
    %s26 = sphi 0, %s33
    %s27 = sphi 0, %s25
    %s28 = sphi 0, %s26
    %s29 = sphi 0, %s27
    %s30 = sphi 0, %s28
    %s46 = sphi 0, %s48
    %s49 = sphi 0, %s46
    %s50 = sphi 0, %s49
    %s66 = sphi 0, %s50
    %s72 = sphi 0, %s74
    %s75 = sphi 0, %s72
    %s76 = sphi 0, %s75
    %s92 = sphi 0, %s76
    %s108 = sphi 0, %s110
    %s111 = sphi 0, %s108
    %s112 = sphi 0, %s111
    %s128 = sphi 0, %s112
    %s144 = sphi 0, %s146
    %s147 = sphi 0, %s144
    %s148 = sphi 0, %s147
    %s164 = sphi 0, %s148
    %s182 = sphi 0, %s184
    %s185 = sphi 0, %s182
    %s186 = sphi 0, %s185
    %s202 = sphi 0, %s186
    %s216 = sphi 0, %s218
    %s219 = sphi 0, %s216
    %s220 = sphi 0, %s219
    %s236 = sphi 0, %s220
  $region4: #{moe_forward.1} parent=0 // loop_header_branch
    %21 = sbr.rel (%p19) target = $region8
  $region5: #{moe_forward.1} parent=0 // loop_body
    %s23 = ssub.s32 %s18, 1
    %s24 = ssub.s32 %s18, 2
    %s31 = sadd.s32 1, %s26
    %p32 = scmp.ge.s32.totalorder %s31, 2
    %s33 = scalar_select %p32, 0, %s31
    %s34 = sadd.s32 1, %s25
    %s35 = scalar_select %p32, %s34, %s25
    %p36 = scmp.ge.s32.totalorder %s35, 5
    %s37 = scalar_select %p36, 0, %s35
    %p38 = scmp.lt.s32.totalorder %s26, 0
    %s39 = scalar_select %p38, %s26, 0
    %p40 = scmp.lt.s32.totalorder %s33, 0
    %s41 = scalar_select %p40, %s33, 0
    %s42 = ssub.s32 %s25, %s37
    %s43 = ssub.s32 %s39, %s41
    %s44 = sor.u32 %s42, %s43
    %p45 = scmp.eq.s32.totalorder %s44, 0
    %s47 = sadd.s32 %s46, 1
    %s48 = scalar_select %p45, %s46, %s47
    %p51 = pneg %p45
    %p52 = scmp.eq.s32.totalorder %s18, 9
    %p53 = por %p51, %p52
    %p54 = scmp.ne.s32.totalorder %s46, %s49
    %p55 = scmp.eq.s32.totalorder %s18, 0
    %p56 = por %p54, %p55
    %p57 = scmp.ne.s32.totalorder %s46, %s49
    %p58 = scmp.eq.s32.totalorder %s23, 9
    %p59 = por %p57, %p58
    %p60 = scmp.ne.s32.totalorder %s49, %s50
    %p61 = scmp.eq.s32.totalorder %s23, 0
    %p62 = por %p60, %p61
    %p63 = scmp.ne.s32.totalorder %s49, %s50
    %p64 = scmp.eq.s32.totalorder %s24, 9
    %p65 = por %p63, %p64
    %p67 = scmp.ne.s32.totalorder %s50, %s66
    %p68 = scmp.eq.s32.totalorder %s24, 0
    %p69 = por %p67, %p68
    %s70 = ssub.s32 %s25, %s37
    %p71 = scmp.eq.s32.totalorder %s70, 0
    %s73 = sadd.s32 %s72, 1
    %s74 = scalar_select %p71, %s72, %s73
    %p77 = pneg %p71
    %p78 = scmp.eq.s32.totalorder %s18, 9
    %p79 = por %p77, %p78
    %p80 = scmp.ne.s32.totalorder %s72, %s75
    %p81 = scmp.eq.s32.totalorder %s18, 0
    %p82 = por %p80, %p81
    %p83 = scmp.ne.s32.totalorder %s72, %s75
    %p84 = scmp.eq.s32.totalorder %s23, 9
    %p85 = por %p83, %p84
    %p86 = scmp.ne.s32.totalorder %s75, %s76
    %p87 = scmp.eq.s32.totalorder %s23, 0
    %p88 = por %p86, %p87
    %p89 = scmp.ne.s32.totalorder %s75, %s76
    %p90 = scmp.eq.s32.totalorder %s24, 9
    %p91 = por %p89, %p90
    %p93 = scmp.ne.s32.totalorder %s76, %s92
    %p94 = scmp.eq.s32.totalorder %s24, 0
    %p95 = por %p93, %p94
    %s96 = smul.u32 %s25, 128
    %s97 = sld [smem:[#allocation6 + %s96]]
    %p98 = scmp.lt.s32.totalorder %s26, 0
    %s99 = scalar_select %p98, %s26, 0
    %s100 = smul.u32 %s37, 128
    %s101 = sld [smem:[#allocation6 + %s100]]
    %p102 = scmp.lt.s32.totalorder %s33, 0
    %s103 = scalar_select %p102, %s33, 0
    %s104 = ssub.s32 %s97, %s101
    %s105 = ssub.s32 %s99, %s103
    %s106 = sor.u32 %s104, %s105
    %p107 = scmp.eq.s32.totalorder %s106, 0
    %s109 = sadd.s32 %s108, 1
    %s110 = scalar_select %p107, %s108, %s109
    %p113 = pneg %p107
    %p114 = scmp.eq.s32.totalorder %s18, 9
    %p115 = por %p113, %p114
    %p116 = scmp.ne.s32.totalorder %s108, %s111
    %p117 = scmp.eq.s32.totalorder %s18, 0
    %p118 = por %p116, %p117
    %p119 = scmp.ne.s32.totalorder %s108, %s111
    %p120 = scmp.eq.s32.totalorder %s23, 9
    %p121 = por %p119, %p120
    %p122 = scmp.ne.s32.totalorder %s111, %s112
    %p123 = scmp.eq.s32.totalorder %s23, 0
    %p124 = por %p122, %p123
    %p125 = scmp.ne.s32.totalorder %s111, %s112
    %p126 = scmp.eq.s32.totalorder %s24, 9
    %p127 = por %p125, %p126
    %p129 = scmp.ne.s32.totalorder %s112, %s128
    %p130 = scmp.eq.s32.totalorder %s24, 0
    %p131 = por %p129, %p130
    %s132 = smul.u32 %s25, 128
    %s133 = sld [smem:[#allocation6 + %s132]]
    %p134 = scmp.lt.s32.totalorder %s26, 0
    %s135 = scalar_select %p134, %s26, 0
    %s136 = smul.u32 %s37, 128
    %s137 = sld [smem:[#allocation6 + %s136]]
    %p138 = scmp.lt.s32.totalorder %s33, 0
    %s139 = scalar_select %p138, %s33, 0
    %s140 = ssub.s32 %s133, %s137
    %s141 = ssub.s32 %s135, %s139
    %s142 = sor.u32 %s140, %s141
    %p143 = scmp.eq.s32.totalorder %s142, 0
    %s145 = sadd.s32 %s144, 1
    %s146 = scalar_select %p143, %s144, %s145
    %p149 = pneg %p143
    %p150 = scmp.eq.s32.totalorder %s18, 9
    %p151 = por %p149, %p150
    %p152 = scmp.ne.s32.totalorder %s144, %s147
    %p153 = scmp.eq.s32.totalorder %s18, 0
    %p154 = por %p152, %p153
    %p155 = scmp.ne.s32.totalorder %s144, %s147
    %p156 = scmp.eq.s32.totalorder %s23, 9
    %p157 = por %p155, %p156
    %p158 = scmp.ne.s32.totalorder %s147, %s148
    %p159 = scmp.eq.s32.totalorder %s23, 0
    %p160 = por %p158, %p159
    %p161 = scmp.ne.s32.totalorder %s147, %s148
    %p162 = scmp.eq.s32.totalorder %s24, 9
    %p163 = por %p161, %p162
    %p165 = scmp.ne.s32.totalorder %s148, %s164
    %p166 = scmp.eq.s32.totalorder %s24, 0
    %p167 = por %p165, %p166
    %s168 = smul.u32 %s25, 128
    %s169 = sld [smem:[#allocation6 + %s168]]
    %s170 = ssub.s32 %s26, 1
    %p171 = scmp.gt.s32.totalorder %s170, 0
    %s172 = scalar_select %p171, %s170, 0
    %s173 = smul.u32 %s37, 128
    %s174 = sld [smem:[#allocation6 + %s173]]
    %s175 = ssub.s32 %s33, 1
    %p176 = scmp.gt.s32.totalorder %s175, 0
    %s177 = scalar_select %p176, %s175, 0
    %s178 = ssub.s32 %s169, %s174
    %s179 = ssub.s32 %s172, %s177
    %s180 = sor.u32 %s178, %s179
    %p181 = scmp.eq.s32.totalorder %s180, 0
    %s183 = sadd.s32 %s182, 1
    %s184 = scalar_select %p181, %s182, %s183
    %p187 = pneg %p181
    %p188 = scmp.eq.s32.totalorder %s18, 9
    %p189 = por %p187, %p188
    %p190 = scmp.ne.s32.totalorder %s182, %s185
    %p191 = scmp.eq.s32.totalorder %s18, 0
    %p192 = por %p190, %p191
    %p193 = scmp.ne.s32.totalorder %s182, %s185
    %p194 = scmp.eq.s32.totalorder %s23, 9
    %p195 = por %p193, %p194
    %p196 = scmp.ne.s32.totalorder %s185, %s186
    %p197 = scmp.eq.s32.totalorder %s23, 0
    %p198 = por %p196, %p197
    %p199 = scmp.ne.s32.totalorder %s185, %s186
    %p200 = scmp.eq.s32.totalorder %s24, 9
    %p201 = por %p199, %p200
    %p203 = scmp.ne.s32.totalorder %s186, %s202
    %p204 = scmp.eq.s32.totalorder %s24, 0
    %p205 = por %p203, %p204
    %s206 = ssub.s32 %s26, 1
    %p207 = scmp.gt.s32.totalorder %s206, 0
    %s208 = scalar_select %p207, %s206, 0
    %s209 = ssub.s32 %s33, 1
    %p210 = scmp.gt.s32.totalorder %s209, 0
    %s211 = scalar_select %p210, %s209, 0
    %s212 = ssub.s32 %s25, %s37
    %s213 = ssub.s32 %s208, %s211
    %s214 = sor.u32 %s212, %s213
    %p215 = scmp.eq.s32.totalorder %s214, 0
    %s217 = sadd.s32 %s216, 1
    %s218 = scalar_select %p215, %s216, %s217
    %p221 = pneg %p215
    %p222 = scmp.eq.s32.totalorder %s18, 9
    %p223 = por %p221, %p222
    %p224 = scmp.ne.s32.totalorder %s216, %s219
    %p225 = scmp.eq.s32.totalorder %s18, 0
    %p226 = por %p224, %p225
    %p227 = scmp.ne.s32.totalorder %s216, %s219
    %p228 = scmp.eq.s32.totalorder %s23, 9
    %p229 = por %p227, %p228
    %p230 = scmp.ne.s32.totalorder %s219, %s220
    %p231 = scmp.eq.s32.totalorder %s23, 0
    %p232 = por %p230, %p231
    %p233 = scmp.ne.s32.totalorder %s219, %s220
    %p234 = scmp.eq.s32.totalorder %s24, 9
    %p235 = por %p233, %p234
    %p237 = scmp.ne.s32.totalorder %s220, %s236
    %p238 = scmp.eq.s32.totalorder %s24, 0
    %p239 = por %p237, %p238
    %p240 = scmp.le.s32.totalorder 1, %s18
    %p241 = scmp.lt.s32.totalorder %s18, 11
    %p242 = pnand %p240, %p241
    %p243 = pneg %p242
    // Predicated region
    $region9: #{moe_forward.1} parent=5 // pred_check
      _
    $region10: #{moe_forward.1} parent=5 // pred_check_branch
      %245 = sbr.rel (%p242) target = $region12
    $region11: #{moe_forward.1} parent=5 // pred_region
      %s246 = ssub.s32 %s18, 1
    $region12: #{moe_forward.1} parent=5 // pred_fallthru
      _
    %p247 = scmp.lt.s32.totalorder %s18, 10
    // Predicated region
    $region13: #{moe_forward.1} parent=5 // pred_check
      %p248 = pneg %p247
    $region14: #{moe_forward.1} parent=5 // pred_check_branch
      %250 = sbr.rel (%p248) target = $region16
    $region15: #{moe_forward.1} parent=5 // pred_region
      // Predicated region
      $region17: #{moe_forward.1} parent=15 // pred_check
        %p251 = pneg %p56
      $region18: #{moe_forward.1} parent=15 // pred_check_branch
        %253 = sbr.rel (%p251) target = $region20
      $region19: #{moe_forward.1} parent=15 // pred_region
        %p254 = scmp.lt.s32.totalorder %s26, 0
        %s255 = scalar_select %p254, %s26, 0
        %s256 = smul.u32 4, %s25
        %p257 = scmp.lt.s32.totalorder %s256, 19
        %s258 = scalar_select %p257, %s256, 19
        %p259 = scmp.lt.s32.totalorder %s255, 0
        %s260 = scalar_select %p259, %s255, 0
        %s261 = sadd.s32 %s260, %s258
        %s262 = smul.addr %s261, 4
        %s263 = scalar_lea.vmem %s1, %s262
        %p264 = scmp.lt.s32.totalorder %s26, 0
        %s265 = scalar_select %p264, %s26, 0
        %s266 = smul.u32 4, %s25
      $region20: #{moe_forward.1} parent=15 // pred_fallthru
        _
      // Predicated region
      $region21: #{moe_forward.1} parent=15 // pred_check
        %p267 = pneg %p82
      $region22: #{moe_forward.1} parent=15 // pred_check_branch
        %269 = sbr.rel (%p267) target = $region24
      $region23: #{moe_forward.1} parent=15 // pred_region
        %s270 = smul.u32 4, %s25
        %p271 = scmp.lt.s32.totalorder %s270, 19
        %s272 = scalar_select %p271, %s270, 19
        %s273 = smul.addr %s272, 8
        %s274 = scalar_lea.vmem %s2, %s273
        %s275 = smul.u32 4, %s25
      $region24: #{moe_forward.1} parent=15 // pred_fallthru
        _
      // Predicated region
      $region25: #{moe_forward.1} parent=15 // pred_check
        %p276 = pneg %p118
      $region26: #{moe_forward.1} parent=15 // pred_check_branch
        %278 = sbr.rel (%p276) target = $region28
      $region27: #{moe_forward.1} parent=15 // pred_region
        %s279 = smul.u32 %s25, 128
        %s280 = sld [smem:[#allocation6 + %s279]]
        %p281 = scmp.lt.s32.totalorder %s26, 0
        %s282 = scalar_select %p281, %s26, 0
        %s283 = smul.u32 4, %s282
        %p284 = scmp.lt.s32.totalorder %s280, 3
        %s285 = scalar_select %p284, %s280, 3
        %p286 = scmp.lt.s32.totalorder %s283, 3
        %s287 = scalar_select %p286, %s283, 3
        %s288 = smul.addr %s285, 4
        %s289 = sadd.s32 %s287, %s288
        %s290 = smul.addr %s289, 4
        %s291 = scalar_lea.vmem %s3, %s290
        %s292 = smul.u32 %s25, 128
        %s293 = sld [smem:[#allocation6 + %s292]]
        %p294 = scmp.lt.s32.totalorder %s26, 0
        %s295 = scalar_select %p294, %s26, 0
        %s296 = smul.u32 4, %s295
      $region28: #{moe_forward.1} parent=15 // pred_fallthru
        _
      // Predicated region
      $region29: #{moe_forward.1} parent=15 // pred_check
        %p297 = pneg %p154
      $region30: #{moe_forward.1} parent=15 // pred_check_branch
        %299 = sbr.rel (%p297) target = $region32
      $region31: #{moe_forward.1} parent=15 // pred_region
        %s300 = smul.u32 %s25, 128
        %s301 = sld [smem:[#allocation6 + %s300]]
        %p302 = scmp.lt.s32.totalorder %s26, 0
        %s303 = scalar_select %p302, %s26, 0
        %s304 = smul.u32 4, %s303
        %p305 = scmp.lt.s32.totalorder %s301, 3
        %s306 = scalar_select %p305, %s301, 3
        %p307 = scmp.lt.s32.totalorder %s304, 3
        %s308 = scalar_select %p307, %s304, 3
        %s309 = smul.addr %s306, 4
        %s310 = sadd.s32 %s308, %s309
        %s311 = smul.addr %s310, 4
        %s312 = scalar_lea.vmem %s4, %s311
        %s313 = smul.u32 %s25, 128
        %s314 = sld [smem:[#allocation6 + %s313]]
        %p315 = scmp.lt.s32.totalorder %s26, 0
        %s316 = scalar_select %p315, %s26, 0
        %s317 = smul.u32 4, %s316
      $region32: #{moe_forward.1} parent=15 // pred_fallthru
        _
      // Predicated region
      $region33: #{moe_forward.1} parent=15 // pred_check
        %p318 = pneg %p192
      $region34: #{moe_forward.1} parent=15 // pred_check_branch
        %320 = sbr.rel (%p318) target = $region36
      $region35: #{moe_forward.1} parent=15 // pred_region
        %s321 = smul.u32 %s25, 128
        %s322 = sld [smem:[#allocation6 + %s321]]
        %s323 = ssub.s32 %s26, 1
        %p324 = scmp.gt.s32.totalorder %s323, 0
        %s325 = scalar_select %p324, %s323, 0
        %p326 = scmp.lt.s32.totalorder %s322, 3
        %s327 = scalar_select %p326, %s322, 3
        %p328 = scmp.lt.s32.totalorder %s325, 0
        %s329 = scalar_select %p328, %s325, 0
        %s330 = smul.addr %s327, 4
        %s331 = sadd.s32 %s329, %s330
        %s332 = smul.addr %s331, 4
        %s333 = scalar_lea.vmem %s5, %s332
        %s334 = smul.u32 %s25, 128
        %s335 = sld [smem:[#allocation6 + %s334]]
        %s336 = ssub.s32 %s26, 1
        %p337 = scmp.gt.s32.totalorder %s336, 0
        %s338 = scalar_select %p337, %s336, 0
      $region36: #{moe_forward.1} parent=15 // pred_fallthru
        _
    $region16: #{moe_forward.1} parent=5 // pred_fallthru
      _
    %p339 = scmp.le.s32.totalorder 1, %s18
    %p340 = scmp.lt.s32.totalorder %s18, 11
    %p341 = pnand %p339, %p340
    %p342 = pneg %p341
    // Predicated region
    $region37: #{moe_forward.1} parent=5 // pred_check
      _
    $region38: #{moe_forward.1} parent=5 // pred_check_branch
      %344 = sbr.rel (%p341) target = $region40
    $region39: #{moe_forward.1} parent=5 // pred_region
      %s345 = ssub.s32 %s18, 1
      %p346 = scmp.lt.s32.totalorder %s28, 0
      %s347 = scalar_select %p346, %s28, 0
      %s348 = smul.u32 4, %s27
      %p349 = scmp.lt.s32.totalorder %s348, 19
      %s350 = scalar_select %p349, %s348, 19
      %p351 = scmp.lt.s32.totalorder %s347, 0
      %s352 = scalar_select %p351, %s347, 0
      %s353 = sadd.s32 %s352, %s350
      %s354 = smul.addr %s353, 4
      %s355 = scalar_lea.vmem %s1, %s354
      %p356 = pneg %p62
      %p357 = pneg %p59
      %s358 = smul.u32 4, %s27
      %p359 = scmp.lt.s32.totalorder %s358, 19
      %s360 = scalar_select %p359, %s358, 19
      %s361 = smul.addr %s360, 8
      %s362 = scalar_lea.vmem %s2, %s361
      %p363 = pneg %p88
      %p364 = pneg %p85
      %s365 = smul.u32 %s27, 128
      %s366 = sld [smem:[#allocation6 + %s365]]
      %p367 = scmp.lt.s32.totalorder %s28, 0
      %s368 = scalar_select %p367, %s28, 0
      %s369 = smul.u32 4, %s368
      %p370 = scmp.lt.s32.totalorder %s366, 3
      %s371 = scalar_select %p370, %s366, 3
      %p372 = scmp.lt.s32.totalorder %s369, 3
      %s373 = scalar_select %p372, %s369, 3
      %s374 = smul.addr %s371, 4
      %s375 = sadd.s32 %s373, %s374
      %s376 = smul.addr %s375, 4
      %s377 = scalar_lea.vmem %s3, %s376
      %p378 = pneg %p124
      %p379 = pneg %p121
      %s380 = smul.u32 %s27, 128
      %s381 = sld [smem:[#allocation6 + %s380]]
      %p382 = scmp.lt.s32.totalorder %s28, 0
      %s383 = scalar_select %p382, %s28, 0
      %s384 = smul.u32 4, %s383
      %p385 = scmp.lt.s32.totalorder %s381, 3
      %s386 = scalar_select %p385, %s381, 3
      %p387 = scmp.lt.s32.totalorder %s384, 3
      %s388 = scalar_select %p387, %s384, 3
      %s389 = smul.addr %s386, 4
      %s390 = sadd.s32 %s388, %s389
      %s391 = smul.addr %s390, 4
      %s392 = scalar_lea.vmem %s4, %s391
      %p393 = pneg %p160
      %p394 = pneg %p157
      %s395 = smul.u32 %s27, 128
      %s396 = sld [smem:[#allocation6 + %s395]]
      %s397 = ssub.s32 %s28, 1
      %p398 = scmp.gt.s32.totalorder %s397, 0
      %s399 = scalar_select %p398, %s397, 0
      %p400 = scmp.lt.s32.totalorder %s396, 3
      %s401 = scalar_select %p400, %s396, 3
      %p402 = scmp.lt.s32.totalorder %s399, 0
      %s403 = scalar_select %p402, %s399, 0
      %s404 = smul.addr %s401, 4
      %s405 = sadd.s32 %s403, %s404
      %s406 = smul.addr %s405, 4
      %s407 = scalar_lea.vmem %s5, %s406
      %p408 = pneg %p198
      %p409 = pneg %p195
      %p410 = pneg %p232
      %p411 = pneg %p229
      %s412 = ssub.s32 %s28, 1
      %p413 = scmp.gt.s32.totalorder %s412, 0
      %s414 = scalar_select %p413, %s412, 0
      %s415 = smul.u32 4, %s27
      %p416 = scmp.lt.s32.totalorder %s415, 19
      %s417 = scalar_select %p416, %s415, 19
      %p418 = scmp.lt.s32.totalorder %s414, 0
      %s419 = scalar_select %p418, %s414, 0
      %s420 = sadd.s32 %s419, %s417
      %s421 = smul.addr %s420, 4
      %s422 = scalar_lea.vmem %s6, %s421
      %p423 = scmp.lt.s32.totalorder %s28, 0
      %s424 = scalar_select %p423, %s28, 0
      %s425 = smul.u32 4, %s27
      %p426 = scmp.lt.s32.totalorder %s425, 19
      %s427 = scalar_select %p426, %s425, 19
      %p428 = scmp.lt.s32.totalorder %s424, 0
      %s429 = scalar_select %p428, %s424, 0
      %s430 = sadd.s32 %s429, %s427
      %s431 = smul.addr %s430, 4
      %s432 = scalar_lea.vmem %s1, %s431
      %p433 = scmp.lt.s32.totalorder %s28, 0
      %s434 = scalar_select %p433, %s28, 0
      %s435 = smul.u32 4, %s27
      %s436 = smul.u32 4, %s27
      %p437 = scmp.lt.s32.totalorder %s436, 19
      %s438 = scalar_select %p437, %s436, 19
      %s439 = smul.addr %s438, 8
      %s440 = scalar_lea.vmem %s2, %s439
      %s441 = smul.u32 4, %s27
      %s442 = smul.u32 %s27, 128
      %s443 = sld [smem:[#allocation6 + %s442]]
      %p444 = scmp.lt.s32.totalorder %s28, 0
      %s445 = scalar_select %p444, %s28, 0
      %s446 = smul.u32 4, %s445
      %p447 = scmp.lt.s32.totalorder %s443, 3
      %s448 = scalar_select %p447, %s443, 3
      %p449 = scmp.lt.s32.totalorder %s446, 3
      %s450 = scalar_select %p449, %s446, 3
      %s451 = smul.addr %s448, 4
      %s452 = sadd.s32 %s450, %s451
      %s453 = smul.addr %s452, 4
      %s454 = scalar_lea.vmem %s3, %s453
      %s455 = smul.u32 %s27, 128
      %s456 = sld [smem:[#allocation6 + %s455]]
      %p457 = scmp.lt.s32.totalorder %s28, 0
      %s458 = scalar_select %p457, %s28, 0
      %s459 = smul.u32 4, %s458
      %s460 = smul.u32 %s27, 128
      %s461 = sld [smem:[#allocation6 + %s460]]
      %p462 = scmp.lt.s32.totalorder %s28, 0
      %s463 = scalar_select %p462, %s28, 0
      %s464 = smul.u32 4, %s463
      %p465 = scmp.lt.s32.totalorder %s461, 3
      %s466 = scalar_select %p465, %s461, 3
      %p467 = scmp.lt.s32.totalorder %s464, 3
      %s468 = scalar_select %p467, %s464, 3
      %s469 = smul.addr %s466, 4
      %s470 = sadd.s32 %s468, %s469
      %s471 = smul.addr %s470, 4
      %s472 = scalar_lea.vmem %s4, %s471
      %s473 = smul.u32 %s27, 128
      %s474 = sld [smem:[#allocation6 + %s473]]
      %p475 = scmp.lt.s32.totalorder %s28, 0
      %s476 = scalar_select %p475, %s28, 0
      %s477 = smul.u32 4, %s476
      %s478 = smul.u32 %s27, 128
      %s479 = sld [smem:[#allocation6 + %s478]]
      %s480 = ssub.s32 %s28, 1
      %p481 = scmp.gt.s32.totalorder %s480, 0
      %s482 = scalar_select %p481, %s480, 0
      %p483 = scmp.lt.s32.totalorder %s479, 3
      %s484 = scalar_select %p483, %s479, 3
      %p485 = scmp.lt.s32.totalorder %s482, 0
      %s486 = scalar_select %p485, %s482, 0
      %s487 = smul.addr %s484, 4
      %s488 = sadd.s32 %s486, %s487
      %s489 = smul.addr %s488, 4
      %s490 = scalar_lea.vmem %s5, %s489
      %s491 = smul.u32 %s27, 128
      %s492 = sld [smem:[#allocation6 + %s491]]
      %s493 = ssub.s32 %s28, 1
      %p494 = scmp.gt.s32.totalorder %s493, 0
      %s495 = scalar_select %p494, %s493, 0
      %s496 = ssub.s32 %s28, 1
      %p497 = scmp.gt.s32.totalorder %s496, 0
      %s498 = scalar_select %p497, %s496, 0
      %s499 = smul.u32 4, %s27
      %p500 = scmp.lt.s32.totalorder %s499, 19
      %s501 = scalar_select %p500, %s499, 19
      %p502 = scmp.lt.s32.totalorder %s498, 0
      %s503 = scalar_select %p502, %s498, 0
      %s504 = sadd.s32 %s503, %s501
      %s505 = smul.addr %s504, 4
      %s506 = scalar_lea.vmem %s6, %s505
      %s507 = ssub.s32 %s28, 1
      %p508 = scmp.gt.s32.totalorder %s507, 0
      %s509 = scalar_select %p508, %s507, 0
      %s510 = smul.u32 4, %s27
      %s512 = smul.u32 %s27, 128
      %s513 = sadd.s32 %s512, 1
      %s514 = sld [smem:[#allocation6 + %s513]]
      %p515 = scmp.gt.s32.totalorder %s514, 0
      %p516 = scmp.eq.s32.totalorder %s28, 0
      %p517 = pnand %p515, %p516
      %p518 = pneg %p517
      // Predicated region
      $region41: #{moe_forward.1} parent=39 // pred_check
        _
      $region42: #{moe_forward.1} parent=39 // pred_check_branch
        %520 = sbr.rel (%p517) target = $region44
      $region43: #{moe_forward.1} parent=39 // pred_region
        %vm521 = vcmask 261120
        %522 = vst.msk [vmem:[#allocation2] sm:$0xff] %vm521, 0.0
        %523 = vst.msk [vmem:[#allocation2 + $0x8] sm:$0xff] %vm521, 0.0
        %524 = vst.msk [vmem:[#allocation2 + $0x10] sm:$0xff] %vm521, 0.0
        %525 = vst.msk [vmem:[#allocation2 + $0x18] sm:$0xff] %vm521, 0.0
        %526 = vst.msk [vmem:[#allocation3] sm:$0xff] %vm521, 0.0
        %527 = vst.msk [vmem:[#allocation3 + $0x8] sm:$0xff] %vm521, 0.0
        %528 = vst.msk [vmem:[#allocation3 + $0x10] sm:$0xff] %vm521, 0.0
        %529 = vst.msk [vmem:[#allocation3 + $0x18] sm:$0xff] %vm521, 0.0
      $region44: #{moe_forward.1} parent=39 // pred_fallthru
        _
      %p530 = scmp.lt.s32.totalorder %s28, 1
      %p531 = pnand %p515, %p530
      %p532 = pneg %p531
      // Predicated region
      $region45: #{moe_forward.1} parent=39 // pred_check
        _
      $region46: #{moe_forward.1} parent=39 // pred_check_branch
        %534 = sbr.rel (%p531) target = $region48
      $region47: #{moe_forward.1} parent=39 // pred_region
        %v535 = vld [vmem:[%s432] sm:$0xf]
        %v536 = vld [vmem:[%s432 + $0x4] sm:$0xf]
        %v537 = vld [vmem:[%s432 + $0x8] sm:$0xf]
        %v538 = vld [vmem:[%s432 + $0xc] sm:$0xf]
        %v539 = vld [vmem:[%s454] sm:$0xf]
        %v540 = vld [vmem:[%s454 + $0x4] sm:$0xf]
        %v541 = vld [vmem:[%s454 + $0x8] sm:$0xf]
        %v542 = vld [vmem:[%s454 + $0xc] sm:$0xf]
        %v547 = vunpack.c.l.b16 %v535
        %v548 = vunpack.c.l.b16 %v536
        %v549 = vunpack.c.l.b16 %v537
        %v550 = vunpack.c.l.b16 %v538
        %v551 = vpack.c.b16 %v548, %v547
        %v552 = vpack.c.b16 %v550, %v549
        %v557 = vunpack.c.l.b16 %v539
        %v558 = vunpack.c.l.b16 %v540
        %v559 = vunpack.c.l.b16 %v541
        %v560 = vunpack.c.l.b16 %v542
        %v561 = vpack.c.b16 %v558, %v557
        %v562 = vpack.c.b16 %v560, %v559
        %vm565 = vcmask 261120
        %v567 = vsel %vm565, %v551, 0
        %v570 = vsel %vm565, %v552, 0
        %572 = vmatprep.subr.bf16.mxu0 0
        %573 = vmatpush1.bf16.msra.mxu0 %v561
        %574 = vmatprep.subr.bf16.mxu0 0
        %575 = vmatpush1.bf16.msra.mxu0 %v562
        %576 = vmatprep.subr.bf16.mxu0 0
        %577 = vmatpush1.bf16.msra.mxu0 0
        %578 = vmatprep.subr.bf16.mxu0 0
        %579 = vmatpush1.bf16.msra.mxu0 0
        %580 = vmatprep.subr.bf16.mxu0 0
        %581 = vmatpush1.bf16.msra.mxu0 0
        %582 = vmatprep.subr.bf16.mxu0 0
        %583 = vmatpush1.bf16.msra.mxu0 0
        %584 = vmatprep.subr.bf16.mxu0 0
        %585 = vmatpush1.bf16.msra.mxu0 0
        %586 = vmatprep.subr.bf16.mxu0 0
        %587 = vmatpush1.bf16.msra.mxu0 0
        %588 = vmatprep.subr.bf16.mxu0 0
        %589 = vmatpush1.bf16.msra.mxu0 0
        %590 = vmatprep.subr.bf16.mxu0 0
        %591 = vmatpush1.bf16.msra.mxu0 0
        %592 = vmatprep.subr.bf16.mxu0 0
        %593 = vmatpush1.bf16.msra.mxu0 0
        %594 = vmatprep.subr.bf16.mxu0 0
        %595 = vmatpush1.bf16.msra.mxu0 0
        %596 = vmatprep.subr.bf16.mxu0 0
        %597 = vmatpush1.bf16.msra.mxu0 0
        %598 = vmatprep.subr.bf16.mxu0 0
        %599 = vmatpush1.bf16.msra.mxu0 0
        %600 = vmatprep.subr.bf16.mxu0 0
        %601 = vmatpush1.bf16.msra.mxu0 0
        %602 = vmatprep.subr.bf16.mxu0 0
        %603 = vmatpush1.bf16.msra.mxu0 0
        %604 = vmatprep.mubr.bf16.mxu0 0
        %605 = vmatmul.mubr.bf16.gmra.mrb[0].mxu0 %v567
        %v606 = vpop.f32.mrb[0].mxu0
        %v607 = vadd.f32 0.0, %v606
        %v608 = vpop.f32.mrb[0].mxu0
        %v609 = vpop.f32.mrb[0].mxu0
        %v610 = vadd.f32 0.0, %v609
        %v611 = vpop.f32.mrb[0].mxu0
        %612 = vmatprep.mubr.bf16.mxu0 0
        %613 = vmatmul.mubr.bf16.gmra.mrb[0].mxu0 %v570
        %v614 = vpop.f32.mrb[0].mxu0
        %v615 = vadd.f32 0.0, %v614
        %v616 = vpop.f32.mrb[0].mxu0
        %v617 = vpop.f32.mrb[0].mxu0
        %v618 = vadd.f32 0.0, %v617
        %v619 = vpop.f32.mrb[0].mxu0
        %620 = vdwg.mxu0
        %v621 = vld [vmem:[#allocation2] sm:$0xff]
        %v622 = vld [vmem:[#allocation2 + $0x8] sm:$0xff]
        %v623 = vld [vmem:[#allocation2 + $0x10] sm:$0xff]
        %v624 = vld [vmem:[#allocation2 + $0x18] sm:$0xff]
        %v625 = vadd.f32 %v621, %v607
        %v626 = vadd.f32 %v622, %v610
        %v627 = vadd.f32 %v623, %v615
        %v628 = vadd.f32 %v624, %v618
        %629 = vst.msk [vmem:[#allocation2] sm:$0xff] %vm565, %v625
        %630 = vst.msk [vmem:[#allocation2 + $0x8] sm:$0xff] %vm565, %v626
        %631 = vst.msk [vmem:[#allocation2 + $0x10] sm:$0xff] %vm565, %v627
        %632 = vst.msk [vmem:[#allocation2 + $0x18] sm:$0xff] %vm565, %v628
        %v633 = vld [vmem:[%s472] sm:$0xf]
        %v634 = vld [vmem:[%s472 + $0x4] sm:$0xf]
        %v635 = vld [vmem:[%s472 + $0x8] sm:$0xf]
        %v636 = vld [vmem:[%s472 + $0xc] sm:$0xf]
        %v641 = vunpack.c.l.b16 %v633
        %v642 = vunpack.c.l.b16 %v634
        %v643 = vunpack.c.l.b16 %v635
        %v644 = vunpack.c.l.b16 %v636
        %v645 = vpack.c.b16 %v642, %v641
        %v646 = vpack.c.b16 %v644, %v643
        %649 = vmatprep.subr.bf16.mxu0 0
        %650 = vmatpush1.bf16.msra.mxu0 %v645
        %651 = vmatprep.subr.bf16.mxu0 0
        %652 = vmatpush1.bf16.msra.mxu0 %v646
        %653 = vmatprep.subr.bf16.mxu0 0
        %654 = vmatpush1.bf16.msra.mxu0 0
        %655 = vmatprep.subr.bf16.mxu0 0
        %656 = vmatpush1.bf16.msra.mxu0 0
        %657 = vmatprep.subr.bf16.mxu0 0
        %658 = vmatpush1.bf16.msra.mxu0 0
        %659 = vmatprep.subr.bf16.mxu0 0
        %660 = vmatpush1.bf16.msra.mxu0 0
        %661 = vmatprep.subr.bf16.mxu0 0
        %662 = vmatpush1.bf16.msra.mxu0 0
        %663 = vmatprep.subr.bf16.mxu0 0
        %664 = vmatpush1.bf16.msra.mxu0 0
        %665 = vmatprep.subr.bf16.mxu0 0
        %666 = vmatpush1.bf16.msra.mxu0 0
        %667 = vmatprep.subr.bf16.mxu0 0
        %668 = vmatpush1.bf16.msra.mxu0 0
        %669 = vmatprep.subr.bf16.mxu0 0
        %670 = vmatpush1.bf16.msra.mxu0 0
        %671 = vmatprep.subr.bf16.mxu0 0
        %672 = vmatpush1.bf16.msra.mxu0 0
        %673 = vmatprep.subr.bf16.mxu0 0
        %674 = vmatpush1.bf16.msra.mxu0 0
        %675 = vmatprep.subr.bf16.mxu0 0
        %676 = vmatpush1.bf16.msra.mxu0 0
        %677 = vmatprep.subr.bf16.mxu0 0
        %678 = vmatpush1.bf16.msra.mxu0 0
        %679 = vmatprep.subr.bf16.mxu0 0
        %680 = vmatpush1.bf16.msra.mxu0 0
        %681 = vmatprep.mubr.bf16.mxu0 0
        %682 = vmatmul.mubr.bf16.gmra.mrb[0].mxu0 %v567
        %v683 = vpop.f32.mrb[0].mxu0
        %v684 = vadd.f32 0.0, %v683
        %v685 = vpop.f32.mrb[0].mxu0
        %v686 = vpop.f32.mrb[0].mxu0
        %v687 = vadd.f32 0.0, %v686
        %v688 = vpop.f32.mrb[0].mxu0
        %689 = vmatprep.mubr.bf16.mxu0 0
        %690 = vmatmul.mubr.bf16.gmra.mrb[0].mxu0 %v570
        %v691 = vpop.f32.mrb[0].mxu0
        %v692 = vadd.f32 0.0, %v691
        %v693 = vpop.f32.mrb[0].mxu0
        %v694 = vpop.f32.mrb[0].mxu0
        %v695 = vadd.f32 0.0, %v694
        %v696 = vpop.f32.mrb[0].mxu0
        %697 = vdwg.mxu0
        %v698 = vld [vmem:[#allocation3] sm:$0xff]
        %v699 = vld [vmem:[#allocation3 + $0x8] sm:$0xff]
        %v700 = vld [vmem:[#allocation3 + $0x10] sm:$0xff]
        %v701 = vld [vmem:[#allocation3 + $0x18] sm:$0xff]
        %v702 = vadd.f32 %v698, %v684
        %v703 = vadd.f32 %v699, %v687
        %v704 = vadd.f32 %v700, %v692
        %v705 = vadd.f32 %v701, %v695
        %706 = vst.msk [vmem:[#allocation3] sm:$0xff] %vm565, %v702
        %707 = vst.msk [vmem:[#allocation3 + $0x8] sm:$0xff] %vm565, %v703
        %708 = vst.msk [vmem:[#allocation3 + $0x10] sm:$0xff] %vm565, %v704
        %709 = vst.msk [vmem:[#allocation3 + $0x18] sm:$0xff] %vm565, %v705
      $region48: #{moe_forward.1} parent=39 // pred_fallthru
        _
      %p710 = scmp.eq.s32.totalorder %s28, 1
      %p711 = pnand %p515, %p710
      %p712 = pneg %p711
      // Predicated region
      $region49: #{moe_forward.1} parent=39 // pred_check
        _
      $region50: #{moe_forward.1} parent=39 // pred_check_branch
        %714 = sbr.rel (%p711) target = $region52
      $region51: #{moe_forward.1} parent=39 // pred_region
        %v715 = vld [vmem:[%s440] sm:$0xff]
        %v716 = vld [vmem:[%s440 + $0x8] sm:$0xff]
        %v717 = vld [vmem:[%s440 + $0x10] sm:$0xff]
        %v718 = vld [vmem:[%s440 + $0x18] sm:$0xff]
        %v719 = vld [vmem:[#allocation2] sm:$0xff]
        %v720 = vld [vmem:[#allocation2 + $0x8] sm:$0xff]
        %v721 = vld [vmem:[#allocation2 + $0x10] sm:$0xff]
        %v722 = vld [vmem:[#allocation2 + $0x18] sm:$0xff]
        %724 = vset.pattern.permute.xlu0 0
        %725 = vperm.xlu0 %724, %v715
        %v726 = vpop.permute.xlu0 %725
        %729 = vset.pattern.permute.xlu0 0
        %730 = vperm.xlu0 %729, %v716
        %v731 = vpop.permute.xlu0 %730
        %734 = vset.pattern.permute.xlu0 0
        %735 = vperm.xlu0 %734, %v717
        %v736 = vpop.permute.xlu0 %735
        %739 = vset.pattern.permute.xlu0 0
        %740 = vperm.xlu0 %739, %v718
        %v741 = vpop.permute.xlu0 %740
        %v743 = vmul.f32 %v719, %v726
        %v744 = vmul.f32 %v720, %v731
        %v745 = vmul.f32 %v721, %v736
        %v746 = vmul.f32 %v722, %v741
        %v747 = vxor.u32 %v743, 2147483648
        %v748 = vxor.u32 %v744, 2147483648
        %v749 = vxor.u32 %v745, 2147483648
        %v750 = vxor.u32 %v746, 2147483648
        %v751 = vmul.f32 %v747, 1.442695
        %v752 = vpow.pop %v751
        %v753 = vmul.f32 %v748, 1.442695
        %v754 = vpow.pop %v753
        %v755 = vmul.f32 %v749, 1.442695
        %v756 = vpow.pop %v755
        %v757 = vmul.f32 %v750, 1.442695
        %v758 = vpow.pop %v757
        %v759 = vadd.f32 %v752, 1.0
        %v760 = vadd.f32 %v754, 1.0
        %v761 = vadd.f32 %v756, 1.0
        %v762 = vadd.f32 %v758, 1.0
        %v763 = vrcp.pop %v759
        %v764 = vmul.f32 1.0, %v763
        %v765 = vrcp.pop %v760
        %v766 = vmul.f32 1.0, %v765
        %v767 = vrcp.pop %v761
        %v768 = vmul.f32 1.0, %v767
        %v769 = vrcp.pop %v762
        %v770 = vmul.f32 1.0, %v769
        %v771 = vmul.f32 %v743, %v764
        %v772 = vmul.f32 %v744, %v766
        %v773 = vmul.f32 %v745, %v768
        %v774 = vmul.f32 %v746, %v770
        %v775 = vld [vmem:[#allocation3] sm:$0xff]
        %v776 = vld [vmem:[#allocation3 + $0x8] sm:$0xff]
        %v777 = vld [vmem:[#allocation3 + $0x10] sm:$0xff]
        %v778 = vld [vmem:[#allocation3 + $0x18] sm:$0xff]
        %v779 = vmul.f32 %v775, %v726
        %v780 = vmul.f32 %v776, %v731
        %v781 = vmul.f32 %v777, %v736
        %v782 = vmul.f32 %v778, %v741
        %v783 = vmul.f32 %v771, %v779
        %v784 = vmul.f32 %v772, %v780
        %v785 = vmul.f32 %v773, %v781
        %v786 = vmul.f32 %v774, %v782
        %v787 = vand.u32 2147483647, %v783
        %v788 = vand.u32 2147483647, %v784
        %v789 = vand.u32 2147483647, %v785
        %v790 = vand.u32 2147483647, %v786
        %vm791 = vcmask 261120
        %v792 = vsel %vm791, %v787, -inf
        %793 = vmax.xlane.f32.xlu0 %v792
        %v794 = vpop.xlane.xlu0 %793
        %v795 = vsel %vm791, %v788, -inf
        %796 = vmax.xlane.f32.xlu0 %v795
        %v797 = vpop.xlane.xlu0 %796
        %v798 = vsel %vm791, %v789, -inf
        %799 = vmax.xlane.f32.xlu0 %v798
        %v800 = vpop.xlane.xlu0 %799
        %v801 = vsel %vm791, %v790, -inf
        %802 = vmax.xlane.f32.xlu0 %v801
        %v803 = vpop.xlane.xlu0 %802
        %v804 = vmax.f32 %v794, 1e-05
        %v805 = vmax.f32 %v797, 1e-05
        %v806 = vmax.f32 %v800, 1e-05
        %v807 = vmax.f32 %v803, 1e-05
        %v808 = vrcp.pop %v804
        %v809 = vmul.f32 127.0, %v808
        %v810 = vrcp.pop %v805
        %v811 = vmul.f32 127.0, %v810
        %v812 = vrcp.pop %v806
        %v813 = vmul.f32 127.0, %v812
        %v814 = vrcp.pop %v807
        %v815 = vmul.f32 127.0, %v814
        %v816 = vmul.f32 %v783, %v809
        %v817 = vmul.f32 %v784, %v811
        %v818 = vmul.f32 %v785, %v813
        %v819 = vmul.f32 %v786, %v815
        %v820 = vround.ne.pseudo %v816
        %v821 = vround.ne.pseudo %v817
        %v822 = vround.ne.pseudo %v818
        %v823 = vround.ne.pseudo %v819
        %v824 = vmax.f32 %v820, -128.0
        %v825 = vmax.f32 %v821, -128.0
        %v826 = vmax.f32 %v822, -128.0
        %v827 = vmax.f32 %v823, -128.0
        %v828 = vmin.f32 %v824, 127.0
        %v829 = vmin.f32 %v825, 127.0
        %v830 = vmin.f32 %v826, 127.0
        %v831 = vmin.f32 %v827, 127.0
        %832 = vst.msk [vmem:[#allocation2] sm:$0xff] %vm791, %v828
        %833 = vst.msk [vmem:[#allocation2 + $0x8] sm:$0xff] %vm791, %v829
        %834 = vst.msk [vmem:[#allocation2 + $0x10] sm:$0xff] %vm791, %v830
        %835 = vst.msk [vmem:[#allocation2 + $0x18] sm:$0xff] %vm791, %v831
        %v836 = vmul.f32 %v804, 0.007874016
        %v837 = vmul.f32 %v805, 0.007874016
        %v838 = vmul.f32 %v806, 0.007874016
        %v839 = vmul.f32 %v807, 0.007874016
        %v840 = vmul.f32 %v836, %v715
        %v841 = vmul.f32 %v837, %v716
        %v842 = vmul.f32 %v838, %v717
        %v843 = vmul.f32 %v839, %v718
        %848 = vrot.lane.b32.xlu0 %v840, 127
        %v849 = vpop.permute.xlu0 %848
        %850 = vrot.lane.b32.xlu0 %v841, 127
        %v851 = vpop.permute.xlu0 %850
        %852 = vrot.lane.b32.xlu0 %v842, 127
        %v853 = vpop.permute.xlu0 %852
        %854 = vrot.lane.b32.xlu0 %v843, 127
        %v855 = vpop.permute.xlu0 %854
        %vm860 = vcmask 7168
        %861 = vst.msk [vmem:[#allocation4] sm:$0xff] %vm860, %v849
        %862 = vst.msk [vmem:[#allocation4 + $0x8] sm:$0xff] %vm860, %v851
        %863 = vst.msk [vmem:[#allocation4 + $0x10] sm:$0xff] %vm860, %v853
        %864 = vst.msk [vmem:[#allocation4 + $0x18] sm:$0xff] %vm860, %v855
      $region52: #{moe_forward.1} parent=39 // pred_fallthru
        _
      %p865 = scmp.ge.s32.totalorder %s28, 1
      %p866 = pnand %p515, %p865
      %p867 = pneg %p866
      // Predicated region
      $region53: #{moe_forward.1} parent=39 // pred_check
        _
      $region54: #{moe_forward.1} parent=39 // pred_check_branch
        %869 = sbr.rel (%p866) target = $region56
      $region55: #{moe_forward.1} parent=39 // pred_region
        %v870 = vld [vmem:[#allocation2] sm:$0xff]
        %v871 = vld [vmem:[#allocation2 + $0x8] sm:$0xff]
        %v872 = vld [vmem:[#allocation2 + $0x10] sm:$0xff]
        %v873 = vld [vmem:[#allocation2 + $0x18] sm:$0xff]
        %v874 = vpack.c.bf16 %v871, %v870
        %v875 = vpack.c.bf16 %v873, %v872
        %v876 = vld [vmem:[%s490] sm:$0xf]
        %v877 = vld [vmem:[%s490 + $0x4] sm:$0xf]
        %v878 = vld [vmem:[%s490 + $0x8] sm:$0xf]
        %v879 = vld [vmem:[%s490 + $0xc] sm:$0xf]
        %v884 = vunpack.c.l.b16 %v876
        %v885 = vunpack.c.l.b16 %v877
        %v886 = vunpack.c.l.b16 %v878
        %v887 = vunpack.c.l.b16 %v879
        %v888 = vpack.c.b16 %v885, %v884
        %v889 = vpack.c.b16 %v887, %v886
        %vm892 = vcmask 261120
        %v894 = vsel %vm892, %v874, 0
        %v897 = vsel %vm892, %v875, 0
        %899 = vmatprep.subr.bf16.mxu0 0
        %900 = vmatpush1.bf16.msra.mxu0 %v888
        %901 = vmatprep.subr.bf16.mxu0 0
        %902 = vmatpush1.bf16.msra.mxu0 %v889
        %903 = vmatprep.subr.bf16.mxu0 0
        %904 = vmatpush1.bf16.msra.mxu0 0
        %905 = vmatprep.subr.bf16.mxu0 0
        %906 = vmatpush1.bf16.msra.mxu0 0
        %907 = vmatprep.subr.bf16.mxu0 0
        %908 = vmatpush1.bf16.msra.mxu0 0
        %909 = vmatprep.subr.bf16.mxu0 0
        %910 = vmatpush1.bf16.msra.mxu0 0
        %911 = vmatprep.subr.bf16.mxu0 0
        %912 = vmatpush1.bf16.msra.mxu0 0
        %913 = vmatprep.subr.bf16.mxu0 0
        %914 = vmatpush1.bf16.msra.mxu0 0
        %915 = vmatprep.subr.bf16.mxu0 0
        %916 = vmatpush1.bf16.msra.mxu0 0
        %917 = vmatprep.subr.bf16.mxu0 0
        %918 = vmatpush1.bf16.msra.mxu0 0
        %919 = vmatprep.subr.bf16.mxu0 0
        %920 = vmatpush1.bf16.msra.mxu0 0
        %921 = vmatprep.subr.bf16.mxu0 0
        %922 = vmatpush1.bf16.msra.mxu0 0
        %923 = vmatprep.subr.bf16.mxu0 0
        %924 = vmatpush1.bf16.msra.mxu0 0
        %925 = vmatprep.subr.bf16.mxu0 0
        %926 = vmatpush1.bf16.msra.mxu0 0
        %927 = vmatprep.subr.bf16.mxu0 0
        %928 = vmatpush1.bf16.msra.mxu0 0
        %929 = vmatprep.subr.bf16.mxu0 0
        %930 = vmatpush1.bf16.msra.mxu0 0
        %931 = vmatprep.mubr.bf16.mxu0 0
        %932 = vmatmul.mubr.bf16.gmra.mrb[0].mxu0 %v894
        %v933 = vpop.f32.mrb[0].mxu0
        %v934 = vadd.f32 0.0, %v933
        %v935 = vpop.f32.mrb[0].mxu0
        %v936 = vpop.f32.mrb[0].mxu0
        %v937 = vadd.f32 0.0, %v936
        %v938 = vpop.f32.mrb[0].mxu0
        %939 = vmatprep.mubr.bf16.mxu0 0
        %940 = vmatmul.mubr.bf16.gmra.mrb[0].mxu0 %v897
        %v941 = vpop.f32.mrb[0].mxu0
        %v942 = vadd.f32 0.0, %v941
        %v943 = vpop.f32.mrb[0].mxu0
        %v944 = vpop.f32.mrb[0].mxu0
        %v945 = vadd.f32 0.0, %v944
        %v946 = vpop.f32.mrb[0].mxu0
        %947 = vdwg.mxu0
        %v948 = vld [vmem:[#allocation4] sm:$0xff]
        %v949 = vld [vmem:[#allocation4 + $0x8] sm:$0xff]
        %v950 = vld [vmem:[#allocation4 + $0x10] sm:$0xff]
        %v951 = vld [vmem:[#allocation4 + $0x18] sm:$0xff]
        %953 = vset.pattern.permute.xlu0 0
        %954 = vperm.xlu0 %953, %v948
        %v955 = vpop.permute.xlu0 %954
        %958 = vset.pattern.permute.xlu0 0
        %959 = vperm.xlu0 %958, %v949
        %v960 = vpop.permute.xlu0 %959
        %963 = vset.pattern.permute.xlu0 0
        %964 = vperm.xlu0 %963, %v950
        %v965 = vpop.permute.xlu0 %964
        %968 = vset.pattern.permute.xlu0 0
        %969 = vperm.xlu0 %968, %v951
        %v970 = vpop.permute.xlu0 %969
        %v972 = vmul.f32 %v934, %v955
        %v973 = vmul.f32 %v937, %v960
        %v974 = vmul.f32 %v942, %v965
        %v975 = vmul.f32 %v945, %v970
        %v976 = vpack.c.bf16 %v973, %v972
        %v977 = vpack.c.bf16 %v975, %v974
        %v980 = vunpack.c.l.b16 %v976
        %v981 = vunpack.c.h.b16 %v976
        %v982 = vunpack.c.l.b16 %v977
        %v983 = vunpack.c.h.b16 %v977
        %v984 = vpack.c.b16 %v980, %v980
        %v985 = vpack.c.b16 %v981, %v981
        %v986 = vpack.c.b16 %v982, %v982
        %v987 = vpack.c.b16 %v983, %v983
        %vm992 = vcmask 257024
        %993 = vst.msk [vmem:[%s506] sm:$0xf] %vm992, %v984
        %994 = vst.msk [vmem:[%s506 + $0x4] sm:$0xf] %vm992, %v985
        %995 = vst.msk [vmem:[%s506 + $0x8] sm:$0xf] %vm992, %v986
        %996 = vst.msk [vmem:[%s506 + $0xc] sm:$0xf] %vm992, %v987
      $region56: #{moe_forward.1} parent=39 // pred_fallthru
        _
      %s997 = ssub.s32 %s28, 1
      %p998 = scmp.gt.s32.totalorder %s997, 0
      %s999 = scalar_select %p998, %s997, 0
      %s1000 = smul.u32 4, %s27
      %p1001 = scmp.lt.s32.totalorder %s1000, 19
      %s1002 = scalar_select %p1001, %s1000, 19
      %p1003 = scmp.lt.s32.totalorder %s999, 0
      %s1004 = scalar_select %p1003, %s999, 0
      %s1005 = sadd.s32 %s1004, %s1002
      %s1006 = smul.addr %s1005, 4
      %s1007 = scalar_lea.vmem %s6, %s1006
      // Predicated region
      $region57: #{moe_forward.1} parent=39 // pred_check
        %p1008 = pneg %p229
      $region58: #{moe_forward.1} parent=39 // pred_check_branch
        %1010 = sbr.rel (%p1008) target = $region60
      $region59: #{moe_forward.1} parent=39 // pred_region
        %s1011 = ssub.s32 %s28, 1
        %p1012 = scmp.gt.s32.totalorder %s1011, 0
        %s1013 = scalar_select %p1012, %s1011, 0
        %s1014 = smul.u32 4, %s27
      $region60: #{moe_forward.1} parent=39 // pred_fallthru
        _
    $region40: #{moe_forward.1} parent=5 // pred_fallthru
      _
    %p1015 = scmp.le.s32.totalorder 2, %s18
    // Predicated region
    $region61: #{moe_forward.1} parent=5 // pred_check
      %p1016 = pneg %p1015
    $region62: #{moe_forward.1} parent=5 // pred_check_branch
      %1018 = sbr.rel (%p1016) target = $region64
    $region63: #{moe_forward.1} parent=5 // pred_region
      %s1019 = ssub.s32 %s18, 2
      // Predicated region
      $region65: #{moe_forward.1} parent=63 // pred_check
        %p1020 = pneg %p235
      $region66: #{moe_forward.1} parent=63 // pred_check_branch
        %1022 = sbr.rel (%p1020) target = $region68
      $region67: #{moe_forward.1} parent=63 // pred_region
        %s1023 = ssub.s32 %s30, 1
        %p1024 = scmp.gt.s32.totalorder %s1023, 0
        %s1025 = scalar_select %p1024, %s1023, 0
        %s1026 = smul.u32 4, %s29
        %p1027 = scmp.lt.s32.totalorder %s1026, 19
        %s1028 = scalar_select %p1027, %s1026, 19
        %p1029 = scmp.lt.s32.totalorder %s1025, 0
        %s1030 = scalar_select %p1029, %s1025, 0
        %s1031 = sadd.s32 %s1030, %s1028
        %s1032 = smul.addr %s1031, 4
        %s1033 = scalar_lea.vmem %s6, %s1032
      $region68: #{moe_forward.1} parent=63 // pred_fallthru
        _
    $region64: #{moe_forward.1} parent=5 // pred_fallthru
      _
  $region6: #{moe_forward.1} parent=0 // loop_footer
    %s22 = sadd.s32 1, %s18
  $region7: #{moe_forward.1} parent=0 // loop_footer_branch
    %17 = sbr.rel target = $region3
  $region8: #{moe_forward.1} parent=0 // loop_exit
    _

</llo_original>
